<compile_context>
chip_gen: v6e
topology: v6e:2x2x1
jax: 0.10.0
libtpu: 0.0.40
codegen_flags: <defaults>
</compile_context>

<pallas_src>
import jax
import jax.numpy as jnp
from jax.experimental import pallas as pl
from jax.experimental.pallas import tpu as pltpu

_LANE = 128
_SUBLANE = 8
_NEG_PAD = -1e30                              # class-padding logit (exp -> 0)
_NEG_INIT = float(jnp.finfo(jnp.float32).min)  # finite "minus infinity" init


def _round_up(v, m):
    return (v + m - 1) // m * m


def _round_down(v, m):
    return max(m, v // m * m)


def _soft_ce_kernel(x_ref, y_ref, loss_ref, m_scr, l_scr, yx_scr, ys_scr):
    """Grid = (row_tiles, class_tiles).  Streams a log-sum-exp over the class
    axis and emits per-row losses for this row tile at the last class tile."""
    k = pl.program_id(1)

    @pl.when(k == 0)
    def _():
        m_scr[...] = jnp.full_like(m_scr, _NEG_INIT)
        l_scr[...] = jnp.zeros_like(l_scr)
        yx_scr[...] = jnp.zeros_like(yx_scr)
        ys_scr[...] = jnp.zeros_like(ys_scr)

    x = x_ref[...].astype(jnp.float32)
    y = y_ref[...].astype(jnp.float32)

    # Lane (class-axis) partial reductions for this tile (XLU work).
    tile_max = jnp.max(x, axis=-1, keepdims=True)
    tile_yx = jnp.sum(y * x, axis=-1, keepdims=True)
    tile_ys = jnp.sum(y, axis=-1, keepdims=True)

    # Online log-sum-exp update (exp is the only EUP op per element).
    m_prev = m_scr[...]
    m_new = jnp.maximum(m_prev, tile_max)
    l_scr[...] = (l_scr[...] * jnp.exp(m_prev - m_new)
                  + jnp.sum(jnp.exp(x - m_new), axis=-1, keepdims=True))
    m_scr[...] = m_new
    yx_scr[...] += tile_yx
    ys_scr[...] += tile_ys

    @pl.when(k == pl.num_programs(1) - 1)
    def _():
        lse = m_scr[...] + jnp.log(l_scr[...])
        # -sum(y * log_softmax(x), -1) == lse * sum(y, -1) - sum(y * x, -1)
        loss_ref[...] = lse * ys_scr[...] - yx_scr[...]


def _vmem_limit_bytes():
    try:
        cap = int(pltpu.get_tpu_info().vmem_capacity_bytes)
    except Exception:
        cap = 64 * 1024 * 1024  # conservative (v7x-sized) fallback
    # Request at most half of physical VMEM as the scoped limit.
    return int(min(cap // 2, 64 * 1024 * 1024))


def _choose_tiles(n, c, itemsize, vmem_limit):
    # 2 inputs x 2 pipeline buffers -> 4 live input tiles; keep ~25% headroom
    # of the scoped limit and cap the per-buffer tile at 4 MiB (past ~1 MiB
    # tiles we are already at the HBM roofline; bigger only burns VMEM).
    target = min(4 * 1024 * 1024, max(256 * 1024, (vmem_limit * 3 // 4) // 4))
    # Class (lane) axis: keep full C unless even an 8-row full-C tile busts the
    # budget; then stream lane tiles of up to 2048 (multiple of 128).
    if c * itemsize * _SUBLANE <= target:
        tile_cols = c
    else:
        tile_cols = min(2048, _round_down(c, _LANE))
    # Batch (sublane) axis: biggest multiple of 8 rows under the budget.
    rows = max(_SUBLANE, target // max(1, tile_cols * itemsize))
    tile_rows = _round_down(rows, _SUBLANE)
    tile_rows = min(tile_rows, _round_up(n, _SUBLANE))
    return tile_rows, tile_cols


def soft_cross_entropy_loss(x, y):
    """Pallas implementation of SoftCrossEntropyLoss.forward(x, y).

    x, y: (N, C) arrays (keep bf16 inputs in bf16 -- the kernel upcasts after
    the DMA).  Returns a float32 scalar.
    """
    assert x.ndim == 2 and x.shape == y.shape
    n, c = x.shape
    itemsize = max(x.dtype.itemsize, y.dtype.itemsize)

    vmem_limit = _vmem_limit_bytes()
    tile_rows, tile_cols = _choose_tiles(n, c, itemsize, vmem_limit)

    # Pad the class axis (only when streaming over it) with a huge negative
    # logit so the softmax is unchanged, and the batch axis with zero rows
    # (y == 0 there, so padded rows contribute exactly 0 loss).
    c_pad = c if tile_cols == c else _round_up(c, tile_cols)
    n_pad = _round_up(n, tile_rows)
    if c_pad != c:
        x = jnp.pad(x, ((0, 0), (0, c_pad - c)),
                    constant_values=jnp.asarray(_NEG_PAD, dtype=x.dtype))
        y = jnp.pad(y, ((0, 0), (0, c_pad - c)))
    if n_pad != n:
        x = jnp.pad(x, ((0, n_pad - n), (0, 0)))
        y = jnp.pad(y, ((0, n_pad - n), (0, 0)))

    grid = (n_pad // tile_rows, c_pad // tile_cols)

    cost = pl.CostEstimate(
        flops=5 * n_pad * c_pad,
        transcendentals=n_pad * c_pad,
        bytes_accessed=(x.size * x.dtype.itemsize
                        + y.size * y.dtype.itemsize
                        + n_pad * 4),
    )

    row_losses = pl.pallas_call(
        _soft_ce_kernel,
        out_shape=jax.ShapeDtypeStruct((n_pad, 1), jnp.float32),
        grid_spec=pltpu.PrefetchScalarGridSpec(
            num_scalar_prefetch=0,
            grid=grid,
            in_specs=[
                pl.BlockSpec((tile_rows, tile_cols), lambda i, k: (i, k)),
                pl.BlockSpec((tile_rows, tile_cols), lambda i, k: (i, k)),
            ],
            out_specs=pl.BlockSpec((tile_rows, 1), lambda i, k: (i, 0)),
            scratch_shapes=[pltpu.VMEM((tile_rows, 1), jnp.float32)] * 4,
        ),
        compiler_params=pltpu.CompilerParams(
            # Row tiles are independent (v7x megacore can split them); the
            # class axis is the reduction axis and comes last in the grid.
            dimension_semantics=("parallel", "arbitrary"),
            vmem_limit_bytes=vmem_limit,
        ),
        cost_estimate=cost,
    )(x, y)

    # Padded rows contribute exactly 0; divide by the ORIGINAL batch size.
    return jnp.sum(row_losses) / n


if __name__ == "__main__":
    key = jax.random.PRNGKey(0)
    kx, ky = jax.random.split(key)

    # Small shapes consistent with the module: batch=8, num_classes=32.
    N, C = 8, 32
    x = jax.random.normal(kx, (N, C), dtype=jnp.float32)
    # Soft labels: softmax-ed random tensor (rows sum to 1, like mixup).
    y = jax.nn.softmax(jax.random.normal(ky, (N, C), dtype=jnp.float32), axis=-1)

    loss = soft_cross_entropy_loss(x, y)
    jax.block_until_ready(loss)

    ref = jnp.sum(-y * jax.nn.log_softmax(x, axis=-1)) / N
    assert jnp.allclose(loss, ref, atol=1e-5, rtol=1e-5), (loss, ref)

    # Also exercise the row-padding path (N not a multiple of the row tile).
    N2 = 10
    x2 = jax.random.normal(kx, (N2, C), dtype=jnp.float32)
    y2 = jax.nn.softmax(jax.random.normal(ky, (N2, C), dtype=jnp.float32), axis=-1)
    loss2 = soft_cross_entropy_loss(x2, y2)
    jax.block_until_ready(loss2)
    ref2 = jnp.sum(-y2 * jax.nn.log_softmax(x2, axis=-1)) / N2
    assert jnp.allclose(loss2, ref2, atol=1e-5, rtol=1e-5), (loss2, ref2)

    print("KERNEL_OK")
</pallas_src>

<mosaic_0001>
module attributes {stable_mosaic.version = 11 : i64} {
  func.func @_soft_ce_kernel(%arg0: i32, %arg1: i32, %arg2: memref<8x32xf32, #tpu.memory_space<vmem>>, %arg3: memref<8x32xf32, #tpu.memory_space<vmem>>, %arg4: memref<8x1xf32, #tpu.memory_space<vmem>>, %arg5: memref<8x1xf32, #tpu.memory_space<vmem>>, %arg6: memref<8x1xf32, #tpu.memory_space<vmem>>, %arg7: memref<8x1xf32, #tpu.memory_space<vmem>>, %arg8: memref<8x1xf32, #tpu.memory_space<vmem>>) attributes {dimension_semantics = [#tpu.dimension_semantics<parallel>, #tpu.dimension_semantics<arbitrary>], iteration_bounds = array<i64: 1, 1>, scalar_prefetch = 0 : i64, scratch_operands = 4 : i64, tpu.core_type = #tpu.core_type<tc>, window_params = [{transform_indices = @transform_0, window_bounds = array<i64: 8, 32>}, {transform_indices = @transform_1, window_bounds = array<i64: 8, 32>}, {transform_indices = @transform_2, window_bounds = array<i64: 8, 1>}]} {
    %c0_i32 = arith.constant 0 : i32
    %0 = arith.cmpi eq, %arg1, %c0_i32 : i32
    %1 = arith.extui %0 : i1 to i32
    %c0_i32_0 = arith.constant 0 : i32
    %2 = arith.cmpi ne, %1, %c0_i32_0 : i32
    scf.if %2 {
      %cst_25 = arith.constant -3.40282347E+38 : f32
      %35 = vector.broadcast %cst_25 : f32 to vector<8x1xf32>
      %c0_26 = arith.constant 0 : index
      %c0_27 = arith.constant 0 : index
      %36 = vector.load %arg5[%c0_26, %c0_27] : memref<8x1xf32, #tpu.memory_space<vmem>>, vector<8x1xf32>
      tpu.vector_store %arg5[%c0_26, %c0_27], %35 {strides = array<i32>} : memref<8x1xf32, #tpu.memory_space<vmem>>, vector<8x1xf32>,
      %cst_28 = arith.constant 0.000000e+00 : f32
      %37 = vector.broadcast %cst_28 : f32 to vector<8x1xf32>
      %c0_29 = arith.constant 0 : index
      %c0_30 = arith.constant 0 : index
      %38 = vector.load %arg6[%c0_29, %c0_30] : memref<8x1xf32, #tpu.memory_space<vmem>>, vector<8x1xf32>
      tpu.vector_store %arg6[%c0_29, %c0_30], %37 {strides = array<i32>} : memref<8x1xf32, #tpu.memory_space<vmem>>, vector<8x1xf32>,
      %cst_31 = arith.constant 0.000000e+00 : f32
      %39 = vector.broadcast %cst_31 : f32 to vector<8x1xf32>
      %c0_32 = arith.constant 0 : index
      %c0_33 = arith.constant 0 : index
      %40 = vector.load %arg7[%c0_32, %c0_33] : memref<8x1xf32, #tpu.memory_space<vmem>>, vector<8x1xf32>
      tpu.vector_store %arg7[%c0_32, %c0_33], %39 {strides = array<i32>} : memref<8x1xf32, #tpu.memory_space<vmem>>, vector<8x1xf32>,
      %cst_34 = arith.constant 0.000000e+00 : f32
      %41 = vector.broadcast %cst_34 : f32 to vector<8x1xf32>
      %c0_35 = arith.constant 0 : index
      %c0_36 = arith.constant 0 : index
      %42 = vector.load %arg8[%c0_35, %c0_36] : memref<8x1xf32, #tpu.memory_space<vmem>>, vector<8x1xf32>
      tpu.vector_store %arg8[%c0_35, %c0_36], %41 {strides = array<i32>} : memref<8x1xf32, #tpu.memory_space<vmem>>, vector<8x1xf32>,
    } else {
    }
    %c0 = arith.constant 0 : index
    %c0_1 = arith.constant 0 : index
    %3 = vector.load %arg2[%c0, %c0_1] : memref<8x32xf32, #tpu.memory_space<vmem>>, vector<8x32xf32>
    %c0_2 = arith.constant 0 : index
    %c0_3 = arith.constant 0 : index
    %4 = vector.load %arg3[%c0_2, %c0_3] : memref<8x32xf32, #tpu.memory_space<vmem>>, vector<8x32xf32>
    %cst = arith.constant dense<0xFF800000> : vector<8xf32>
    %5 = vector.multi_reduction <maximumf>, %3, %cst [1] : vector<8x32xf32> to vector<8xf32>
    %6 = vector.shape_cast %5 : vector<8xf32> to vector<8x1xf32>
    %7 = arith.mulf %4, %3 : vector<8x32xf32>
    %cst_4 = arith.constant dense<0.000000e+00> : vector<8xf32>
    %8 = vector.multi_reduction <add>, %7, %cst_4 [1] : vector<8x32xf32> to vector<8xf32>
    %9 = vector.shape_cast %8 : vector<8xf32> to vector<8x1xf32>
    %cst_5 = arith.constant dense<0.000000e+00> : vector<8xf32>
    %10 = vector.multi_reduction <add>, %4, %cst_5 [1] : vector<8x32xf32> to vector<8xf32>
    %11 = vector.shape_cast %10 : vector<8xf32> to vector<8x1xf32>
    %c0_6 = arith.constant 0 : index
    %c0_7 = arith.constant 0 : index
    %12 = vector.load %arg5[%c0_6, %c0_7] : memref<8x1xf32, #tpu.memory_space<vmem>>, vector<8x1xf32>
    %13 = arith.maximumf %12, %6 : vector<8x1xf32>
    %c0_8 = arith.constant 0 : index
    %c0_9 = arith.constant 0 : index
    %14 = vector.load %arg6[%c0_8, %c0_9] : memref<8x1xf32, #tpu.memory_space<vmem>>, vector<8x1xf32>
    %15 = arith.subf %12, %13 : vector<8x1xf32>
    %16 = math.exp %15 : vector<8x1xf32>
    %17 = arith.mulf %14, %16 : vector<8x1xf32>
    %18 = vector.broadcast %13 : vector<8x1xf32> to vector<8x32xf32>
    %19 = arith.subf %3, %18 : vector<8x32xf32>
    %20 = math.exp %19 : vector<8x32xf32>
    %cst_10 = arith.constant dense<0.000000e+00> : vector<8xf32>
    %21 = vector.multi_reduction <add>, %20, %cst_10 [1] : vector<8x32xf32> to vector<8xf32>
    %22 = vector.shape_cast %21 : vector<8xf32> to vector<8x1xf32>
    %23 = arith.addf %17, %22 : vector<8x1xf32>
    %c0_11 = arith.constant 0 : index
    %c0_12 = arith.constant 0 : index
    %24 = vector.load %arg6[%c0_11, %c0_12] : memref<8x1xf32, #tpu.memory_space<vmem>>, vector<8x1xf32>
    tpu.vector_store %arg6[%c0_11, %c0_12], %23 {strides = array<i32>} : memref<8x1xf32, #tpu.memory_space<vmem>>, vector<8x1xf32>,
    %c0_13 = arith.constant 0 : index
    %c0_14 = arith.constant 0 : index
    %25 = vector.load %arg5[%c0_13, %c0_14] : memref<8x1xf32, #tpu.memory_space<vmem>>, vector<8x1xf32>
    tpu.vector_store %arg5[%c0_13, %c0_14], %13 {strides = array<i32>} : memref<8x1xf32, #tpu.memory_space<vmem>>, vector<8x1xf32>,
    %c0_15 = arith.constant 0 : index
    %c0_16 = arith.constant 0 : index
    %26 = vector.load %arg7[%c0_15, %c0_16] : memref<8x1xf32, #tpu.memory_space<vmem>>, vector<8x1xf32>
    %27 = arith.addf %26, %9 : vector<8x1xf32>
    %c0_17 = arith.constant 0 : index
    %c0_18 = arith.constant 0 : index
    %28 = vector.load %arg7[%c0_17, %c0_18] : memref<8x1xf32, #tpu.memory_space<vmem>>, vector<8x1xf32>
    tpu.vector_store %arg7[%c0_17, %c0_18], %27 {strides = array<i32>} : memref<8x1xf32, #tpu.memory_space<vmem>>, vector<8x1xf32>,
    %c0_19 = arith.constant 0 : index
    %c0_20 = arith.constant 0 : index
    %29 = vector.load %arg8[%c0_19, %c0_20] : memref<8x1xf32, #tpu.memory_space<vmem>>, vector<8x1xf32>
    %30 = arith.addf %29, %11 : vector<8x1xf32>
    %c0_21 = arith.constant 0 : index
    %c0_22 = arith.constant 0 : index
    %31 = vector.load %arg8[%c0_21, %c0_22] : memref<8x1xf32, #tpu.memory_space<vmem>>, vector<8x1xf32>
    tpu.vector_store %arg8[%c0_21, %c0_22], %30 {strides = array<i32>} : memref<8x1xf32, #tpu.memory_space<vmem>>, vector<8x1xf32>,
    %c0_i32_23 = arith.constant 0 : i32
    %32 = arith.cmpi eq, %arg1, %c0_i32_23 : i32
    %33 = arith.extui %32 : i1 to i32
    %c0_i32_24 = arith.constant 0 : i32
    %34 = arith.cmpi ne, %33, %c0_i32_24 : i32
    scf.if %34 {
      %c0_25 = arith.constant 0 : index
      %c0_26 = arith.constant 0 : index
      %35 = vector.load %arg5[%c0_25, %c0_26] : memref<8x1xf32, #tpu.memory_space<vmem>>, vector<8x1xf32>
      %c0_27 = arith.constant 0 : index
      %c0_28 = arith.constant 0 : index
      %36 = vector.load %arg6[%c0_27, %c0_28] : memref<8x1xf32, #tpu.memory_space<vmem>>, vector<8x1xf32>
      %37 = math.log %36 : vector<8x1xf32>
      %38 = arith.addf %35, %37 : vector<8x1xf32>
      %c0_29 = arith.constant 0 : index
      %c0_30 = arith.constant 0 : index
      %39 = vector.load %arg8[%c0_29, %c0_30] : memref<8x1xf32, #tpu.memory_space<vmem>>, vector<8x1xf32>
      %40 = arith.mulf %38, %39 : vector<8x1xf32>
      %c0_31 = arith.constant 0 : index
      %c0_32 = arith.constant 0 : index
      %41 = vector.load %arg7[%c0_31, %c0_32] : memref<8x1xf32, #tpu.memory_space<vmem>>, vector<8x1xf32>
      %42 = arith.subf %40, %41 : vector<8x1xf32>
      %c0_33 = arith.constant 0 : index
      %c0_34 = arith.constant 0 : index
      %43 = vector.load %arg4[%c0_33, %c0_34] : memref<8x1xf32, #tpu.memory_space<vmem>>, vector<8x1xf32>
      tpu.vector_store %arg4[%c0_33, %c0_34], %42 {strides = array<i32>} : memref<8x1xf32, #tpu.memory_space<vmem>>, vector<8x1xf32>,
    } else {
    }
    return
  }
  func.func @transform_0(%arg0: i32, %arg1: i32) -> (i32, i32) {
    %c0_i32 = arith.constant 0 : i32
    return %arg0, %arg1 : i32, i32
  }
  func.func @transform_1(%arg0: i32, %arg1: i32) -> (i32, i32) {
    %c0_i32 = arith.constant 0 : i32
    return %arg0, %arg1 : i32, i32
  }
  func.func @transform_2(%arg0: i32, %arg1: i32) -> (i32, i32) {
    %c0_i32 = arith.constant 0 : i32
    %c0_i32_0 = arith.constant 0 : i32
    return %arg0, %c0_i32 : i32, i32
  }
}

</mosaic_0001>

<llo_original>
// kernel: tpu_custom_call.1
$region0: #{tpu_custom_call.1}
  #allocation0 [shape = 'u32[]', space=smem, size = 0x4, offset = 0x4, fixed_abs, tag = 'smem constant byte address 0x4 - core index']
  #allocation1 [shape = 'u32[144,128]{1,0:T(1,128)}', space=vmem, size = 0x12000, scoped, tag = 'internal scratch']
  #allocation2 [shape = 'f32[8,1]{1,0:T(8,128)}', space=vmem, size = 0x1000, scoped, tag = 'scratch operand']
  #allocation3 [shape = 'f32[8,1]{1,0:T(8,128)}', space=vmem, size = 0x1000, scoped, tag = 'scratch operand']
  #allocation4 [shape = 'f32[8,1]{1,0:T(8,128)}', space=vmem, size = 0x1000, scoped, tag = 'scratch operand']
  #allocation5 [shape = 'f32[8,1]{1,0:T(8,128)}', space=vmem, size = 0x1000, scoped, tag = 'scratch operand']
  %s0 = inlined_call_operand.hbm [shape: f32[8,32], index: 0, kind: input, shape index: {}]
  %s1 = inlined_call_operand.hbm [shape: f32[8,32], index: 1, kind: input, shape index: {}]
  %s2 = inlined_call_operand.vmem [shape: f32[8,1], index: 2, kind: output, shape index: {}]
  %s3 = sld [smem:[#allocation0]]
  $region34: #{tpu_custom_call.1} parent=0
    _
  %s5 = ssub.s32 1, %s3
  %s6 = scalar_select 0, %s5, %s3
  $region1: #{tpu_custom_call.1} parent=0
    #allocation6 [shape = 'u8[4096]{0}', space=vmem, size = 0x1000, scoped, tag = 'input window, operand 0, single buffered']
    #allocation7 [shape = 's32[1]{0}', space=sflag, size = 0x4, scoped, tag = 'scoped memory for tpu_custom_call.1']
    #allocation8 [shape = 'u8[4096]{0}', space=vmem, size = 0x1000, scoped, tag = 'input window, operand 1, single buffered']
    #allocation9 [shape = 's32[1]{0}', space=sflag, size = 0x4, scoped, tag = 'scoped memory for tpu_custom_call.1']
    %7 = vsyncpa [#allocation7], 0
    %8 = vsyncpa [#allocation9], 0
    // Predicated region
    $region2: #{tpu_custom_call.1} parent=1 // pred_check
      _
    $region3: #{tpu_custom_call.1} parent=1 // pred_check_branch
      %10 = sbr.rel (0) target = $region5
    $region4: #{tpu_custom_call.1} parent=1 // pred_region
      %s12 = ssub.s32 128, 128
      %13 = vsyncadd [#allocation7], %s12
      %s15 = sshll.u32 [#allocation6], 4
      %s16 = int_to_ptr.vmem [resolvable:$true] %s15
      %18 = dma.hbm_to_vmem [thread:$0]  %s0, 128, %s16, [#allocation7]
    $region5: #{tpu_custom_call.1} parent=1 // pred_fallthru
      _
    // Predicated region
    $region6: #{tpu_custom_call.1} parent=1 // pred_check
      _
    $region7: #{tpu_custom_call.1} parent=1 // pred_check_branch
      %20 = sbr.rel (0) target = $region9
    $region8: #{tpu_custom_call.1} parent=1 // pred_region
      %s22 = ssub.s32 128, 128
      %23 = vsyncadd [#allocation9], %s22
      %s25 = sshll.u32 [#allocation8], 4
      %s26 = int_to_ptr.vmem [resolvable:$true] %s25
      %28 = dma.hbm_to_vmem [thread:$0]  %s1, 128, %s26, [#allocation9]
    $region9: #{tpu_custom_call.1} parent=1 // pred_fallthru
      _
    // Predicated region
    $region10: #{tpu_custom_call.1} parent=1 // pred_check
      _
    $region11: #{tpu_custom_call.1} parent=1 // pred_check_branch
      %30 = sbr.rel (0) target = $region13
    $region12: #{tpu_custom_call.1} parent=1 // pred_region
      %31 = dma.done [#allocation7], 128
    $region13: #{tpu_custom_call.1} parent=1 // pred_fallthru
      _
    // Predicated region
    $region14: #{tpu_custom_call.1} parent=1 // pred_check
      _
    $region15: #{tpu_custom_call.1} parent=1 // pred_check_branch
      %33 = sbr.rel (0) target = $region17
    $region16: #{tpu_custom_call.1} parent=1 // pred_region
      %34 = dma.done [#allocation9], 128
    $region17: #{tpu_custom_call.1} parent=1 // pred_fallthru
      _
    %p35 = scmp.eq.s32.totalorder 0, 0
    // Predicated region
    $region18: #{tpu_custom_call.1} parent=1 // pred_check
      %p36 = pneg %p35
    $region19: #{tpu_custom_call.1} parent=1 // pred_check_branch
      %38 = sbr.rel (%p36) target = $region21
    $region20: #{tpu_custom_call.1} parent=1 // pred_region
      %vm39 = vcmask 7168
      %40 = vst.msk [vmem:[#allocation2] sm:$0xff] %vm39, -3.4028235e+38
      %41 = vst.msk [vmem:[#allocation3] sm:$0xff] %vm39, 0.0
      %42 = vst.msk [vmem:[#allocation4] sm:$0xff] %vm39, 0.0
      %43 = vst.msk [vmem:[#allocation5] sm:$0xff] %vm39, 0.0
    $region21: #{tpu_custom_call.1} parent=1 // pred_fallthru
      _
    %v44 = vld [vmem:[#allocation6] sm:$0xff]
    %v45 = vld [vmem:[#allocation8] sm:$0xff]
    %vm46 = vcmask 261120
    %v47 = vsel %vm46, %v44, -inf
    %48 = vmax.xlane.f32.xlu0 %v47
    %v49 = vpop.xlane.xlu0 %48
    %v50 = vmul.f32 %v45, %v44
    %v51 = vsel %vm46, %v50, 0.0
    %52 = vadd.xlane.f32.xlu0 %v51
    %v53 = vpop.xlane.xlu0 %52
    %v54 = vsel %vm46, %v45, 0.0
    %55 = vadd.xlane.f32.xlu0 %v54
    %v56 = vpop.xlane.xlu0 %55
    %v57 = vld [vmem:[#allocation2] sm:$0xff]
    %v58 = vmax.f32 %v57, %v49
    %v59 = vld [vmem:[#allocation3] sm:$0xff]
    %v60 = vsub.f32 %v57, %v58
    %v61 = vmul.f32 %v60, 1.442695
    %v62 = vpow.pop %v61
    %v63 = vmul.f32 %v59, %v62
    %65 = vset.pattern.permute.xlu0 0
    %66 = vperm.xlu0 %65, %v58
    %v67 = vpop.permute.xlu0 %66
    %v69 = vsub.f32 %v44, %v67
    %v70 = vmul.f32 %v69, 1.442695
    %v71 = vpow.pop %v70
    %v72 = vsel %vm46, %v71, 0.0
    %73 = vadd.xlane.f32.xlu0 %v72
    %v74 = vpop.xlane.xlu0 %73
    %v75 = vadd.f32 %v63, %v74
    %vm76 = vcmask 7168
    %77 = vst.msk [vmem:[#allocation3] sm:$0xff] %vm76, %v75
    %78 = vst.msk [vmem:[#allocation2] sm:$0xff] %vm76, %v58
    %v79 = vld [vmem:[#allocation4] sm:$0xff]
    %v80 = vadd.f32 %v79, %v53
    %81 = vst.msk [vmem:[#allocation4] sm:$0xff] %vm76, %v80
    %v82 = vld [vmem:[#allocation5] sm:$0xff]
    %v83 = vadd.f32 %v82, %v56
    %84 = vst.msk [vmem:[#allocation5] sm:$0xff] %vm76, %v83
    // Predicated region
    $region22: #{tpu_custom_call.1} parent=1 // pred_check
      %p85 = pneg %p35
    $region23: #{tpu_custom_call.1} parent=1 // pred_check_branch
      %87 = sbr.rel (%p85) target = $region25
    $region24: #{tpu_custom_call.1} parent=1 // pred_region
      %v88 = vld [vmem:[#allocation2] sm:$0xff]
      %v89 = vld [vmem:[#allocation3] sm:$0xff]
      %v90 = vlog2.pop %v89
      %v91 = vmul.f32 %v90, 0.6931472
      %v92 = vadd.f32 %v88, %v91
      %v93 = vld [vmem:[#allocation5] sm:$0xff]
      %v94 = vmul.f32 %v92, %v93
      %v95 = vld [vmem:[#allocation4] sm:$0xff]
      %v96 = vsub.f32 %v94, %v95
      %97 = vst.msk [vmem:[%s2] sm:$0xff] %vm76, %v96
    $region25: #{tpu_custom_call.1} parent=1 // pred_fallthru
      _
    // Predicated region
    $region26: #{tpu_custom_call.1} parent=1 // pred_check
      _
    $region27: #{tpu_custom_call.1} parent=1 // pred_check_branch
      %99 = sbr.rel (0) target = $region29
    $region28: #{tpu_custom_call.1} parent=1 // pred_region
      _
    $region29: #{tpu_custom_call.1} parent=1 // pred_fallthru
      _
    // Predicated region
    $region30: #{tpu_custom_call.1} parent=1 // pred_check
      _
    $region31: #{tpu_custom_call.1} parent=1 // pred_check_branch
      %101 = sbr.rel (0) target = $region33
    $region32: #{tpu_custom_call.1} parent=1 // pred_region
      _
    $region33: #{tpu_custom_call.1} parent=1 // pred_fallthru
      _
    %102 = vsyncpa [#allocation7], 1
    %103 = vsyncpa [#allocation9], 1

</llo_original>
